<compile_context>
chip_gen: v7x
topology: tpu7x:2x2x1
jax: 0.10.0
libtpu: 0.0.40
codegen_flags: <defaults>
</compile_context>

<pallas_src>
import jax
import jax.numpy as jnp
from jax import lax
from jax.experimental import pallas as pl
from jax.experimental.pallas import tpu as pltpu

OBS_DIM = 4
NUM_HIDDEN = 128
ACTION_DIM = 2
MAX_TILE_B = 256  # batch tile on the lane axis (keeps h = (128, TILE_B) f32 <= 32 vregs)


def _round_up(n, m):
    return pl.cdiv(n, m) * m


def nn_policy_kernel(x_ref, w1_ref, b1_ref, dw_ref, db_ref, ot_ref):
    # x_ref : (TILE_B, OBS_DIM)          -- native input layout, no HBM transpose
    # w1_ref: (H, OBS_DIM), b1_ref: (H, 1)
    # dw_ref: (1, H) = w2[1]-w2[0], db_ref: (1, 1) = b2[1]-b2[0]
    # ot_ref: (ACTION_DIM, TILE_B)       -- batch on lanes, lane-dense output
    # Layer 1: contract OBS_DIM of both operands -> (H, TILE_B) directly.
    h = lax.dot_general(
        w1_ref[...], x_ref[...],
        dimension_numbers=(((1,), (1,)), ((), ())),
        preferred_element_type=jnp.float32,
    )
    h = jnp.maximum(h + b1_ref[...], 0.0)                      # (H, TILE_B) ReLU
    # Layer 2 + 2-class softmax as a sigmoid of the logit difference.
    d = jnp.dot(dw_ref[...], h, preferred_element_type=jnp.float32) + db_ref[...]
    p1 = 1.0 / (1.0 + jnp.exp(-d))                              # (1, TILE_B)
    p0 = 1.0 - p1                                               # sums to 1 exactly
    ot_ref[...] = jnp.concatenate([p0, p1], axis=0).astype(ot_ref.dtype)


@jax.jit
def nn_policy_forward(x, w1, b1, w2, b2):
    """x: (B, OBS_DIM) f32 -> (B, ACTION_DIM) action probabilities.

    Weights/biases in PyTorch nn.Linear layout: w1 (H, 4), b1 (H,), w2 (2, H), b2 (2,).
    """
    B = x.shape[0]
    tile_b = min(MAX_TILE_B, _round_up(B, 128))
    b_pad = _round_up(B, tile_b)
    if b_pad != B:
        x = jnp.pad(x, ((0, b_pad - B), (0, 0)))
    grid = (b_pad // tile_b,)

    # Tiny per-call parameter reshapes (weights only; negligible).
    b1_col = b1.reshape(NUM_HIDDEN, 1)
    dw = (w2[1] - w2[0]).reshape(1, NUM_HIDDEN)
    db = (b2[1] - b2[0]).reshape(1, 1)

    cost = pl.CostEstimate(
        flops=2 * b_pad * (OBS_DIM * NUM_HIDDEN + NUM_HIDDEN),
        transcendentals=b_pad,
        bytes_accessed=4 * (b_pad * (OBS_DIM + ACTION_DIM)
                            + NUM_HIDDEN * (OBS_DIM + 2) + 1),
    )

    out_t = pl.pallas_call(
        nn_policy_kernel,
        out_shape=jax.ShapeDtypeStruct((ACTION_DIM, b_pad), jnp.float32),
        grid_spec=pl.GridSpec(
            grid=grid,
            in_specs=[
                pl.BlockSpec((tile_b, OBS_DIM), lambda i: (i, 0)),        # x tile (native layout)
                pl.BlockSpec((NUM_HIDDEN, OBS_DIM), lambda i: (0, 0)),    # W1
                pl.BlockSpec((NUM_HIDDEN, 1), lambda i: (0, 0)),          # b1
                pl.BlockSpec((1, NUM_HIDDEN), lambda i: (0, 0)),          # dw = w2[1]-w2[0]
                pl.BlockSpec((1, 1), lambda i: (0, 0)),                   # db = b2[1]-b2[0]
            ],
            out_specs=pl.BlockSpec((ACTION_DIM, tile_b), lambda i: (0, i)),
        ),
        compiler_params=pltpu.CompilerParams(
            dimension_semantics=("parallel",)),  # batch axis shards across v7x TCs
        cost_estimate=cost,
    )(x, w1, b1_col, dw, db)

    # TODO(synk): downstream consumers could use the (2, B) layout directly and
    # skip this (cheap: only 8*B bytes) transpose.
    return out_t[:, :B].T  # (B, ACTION_DIM)


def init_params(key, num_hidden=NUM_HIDDEN):
    # nn.Linear-style init, PyTorch layout: weight (out_features, in_features), bias (out_features,)
    k1, k2, k3, k4 = jax.random.split(key, 4)
    bound1 = 1.0 / jnp.sqrt(jnp.float32(OBS_DIM))
    bound2 = 1.0 / jnp.sqrt(jnp.float32(num_hidden))
    w1 = jax.random.uniform(k1, (num_hidden, OBS_DIM), jnp.float32, -bound1, bound1)
    b1 = jax.random.uniform(k2, (num_hidden,), jnp.float32, -bound1, bound1)
    w2 = jax.random.uniform(k3, (ACTION_DIM, num_hidden), jnp.float32, -bound2, bound2)
    b2 = jax.random.uniform(k4, (ACTION_DIM,), jnp.float32, -bound2, bound2)
    return w1, b1, w2, b2


def _reference(x, w1, b1, w2, b2):
    h = jnp.maximum(x @ w1.T + b1[None, :], 0.0)
    logits = h @ w2.T + b2[None, :]
    return jax.nn.softmax(logits, axis=-1)


if __name__ == "__main__":
    key = jax.random.PRNGKey(0)
    pkey, xkey1, xkey2 = jax.random.split(key, 3)
    w1, b1, w2, b2 = init_params(pkey)

    # Small batch: single 128-lane tile (adaptive padding).
    B1 = 8
    x1 = jax.random.normal(xkey1, (B1, OBS_DIM), jnp.float32)
    probs1 = jax.block_until_ready(nn_policy_forward(x1, w1, b1, w2, b2))
    ref1 = _reference(x1, w1, b1, w2, b2)
    assert probs1.shape == (B1, ACTION_DIM)
    assert jnp.allclose(probs1, ref1, atol=2e-3, rtol=2e-3)
    assert jnp.allclose(jnp.sum(probs1, axis=-1), 1.0, atol=1e-5)

    # Larger batch: multi-step grid + remainder padding path.
    B2 = 300
    x2 = jax.random.normal(xkey2, (B2, OBS_DIM), jnp.float32)
    probs2 = jax.block_until_ready(nn_policy_forward(x2, w1, b1, w2, b2))
    ref2 = _reference(x2, w1, b1, w2, b2)
    assert probs2.shape == (B2, ACTION_DIM)
    assert jnp.allclose(probs2, ref2, atol=2e-3, rtol=2e-3)
    assert jnp.allclose(jnp.sum(probs2, axis=-1), 1.0, atol=1e-5)

    print("KERNEL_OK")
</pallas_src>

<mosaic_0001>
module attributes {stable_mosaic.version = 11 : i64} {
  func.func @nn_policy_kernel(%arg0: i32, %arg1: memref<128x4xf32, #tpu.memory_space<vmem>>, %arg2: memref<128x4xf32, #tpu.memory_space<vmem>>, %arg3: memref<128x1xf32, #tpu.memory_space<vmem>>, %arg4: memref<1x128xf32, #tpu.memory_space<vmem>>, %arg5: memref<1x1xf32, #tpu.memory_space<vmem>>, %arg6: memref<2x128xf32, #tpu.memory_space<vmem>>) attributes {dimension_semantics = [#tpu.dimension_semantics<parallel>], iteration_bounds = array<i64: 1>, scalar_prefetch = 0 : i64, scratch_operands = 0 : i64, tpu.core_type = #tpu.core_type<tc>, window_params = [{transform_indices = @transform_0, window_bounds = array<i64: 128, 4>}, {pipeline_mode = #tpu.pipeline_mode<synchronous>, transform_indices = @transform_1, window_bounds = array<i64: 128, 4>}, {pipeline_mode = #tpu.pipeline_mode<synchronous>, transform_indices = @transform_2, window_bounds = array<i64: 128, 1>}, {pipeline_mode = #tpu.pipeline_mode<synchronous>, transform_indices = @transform_3, window_bounds = array<i64: 1, 128>}, {pipeline_mode = #tpu.pipeline_mode<synchronous>, transform_indices = @transform_4, window_bounds = array<i64: 1, 1>}, {transform_indices = @transform_5, window_bounds = array<i64: 2, 128>}]} {
    %c0 = arith.constant 0 : index
    %c0_0 = arith.constant 0 : index
    %0 = vector.load %arg2[%c0, %c0_0] : memref<128x4xf32, #tpu.memory_space<vmem>>, vector<128x4xf32>
    %c0_1 = arith.constant 0 : index
    %c0_2 = arith.constant 0 : index
    %1 = vector.load %arg1[%c0_1, %c0_2] : memref<128x4xf32, #tpu.memory_space<vmem>>, vector<128x4xf32>
    %cst = arith.constant dense<0.000000e+00> : vector<128x128xf32>
    %2 = tpu.matmul %0, %1, %cst {dimension_numbers = #tpu.dot_dimension_numbers<[1], [1], [0], [0], [0, 0, 1, 0], [], []>} : vector<128x4xf32>, vector<128x4xf32>, vector<128x128xf32> -> vector<128x128xf32>
    %c0_3 = arith.constant 0 : index
    %c0_4 = arith.constant 0 : index
    %3 = vector.load %arg3[%c0_3, %c0_4] : memref<128x1xf32, #tpu.memory_space<vmem>>, vector<128x1xf32>
    %4 = vector.broadcast %3 : vector<128x1xf32> to vector<128x128xf32>
    %5 = arith.addf %2, %4 : vector<128x128xf32>
    %cst_5 = arith.constant 0.000000e+00 : f32
    %6 = vector.broadcast %cst_5 : f32 to vector<128x128xf32>
    %7 = arith.maximumf %5, %6 : vector<128x128xf32>
    %c0_6 = arith.constant 0 : index
    %c0_7 = arith.constant 0 : index
    %8 = vector.load %arg4[%c0_6, %c0_7] : memref<1x128xf32, #tpu.memory_space<vmem>>, vector<1x128xf32>
    %cst_8 = arith.constant dense<0.000000e+00> : vector<1x128xf32>
    %9 = tpu.matmul %8, %7, %cst_8 {dimension_numbers = #tpu.dot_dimension_numbers<[1], [0], [0], [1], [0, 0, 1, 1], [], []>} : vector<1x128xf32>, vector<128x128xf32>, vector<1x128xf32> -> vector<1x128xf32>
    %c0_9 = arith.constant 0 : index
    %c0_10 = arith.constant 0 : index
    %10 = vector.load %arg5[%c0_9, %c0_10] : memref<1x1xf32, #tpu.memory_space<vmem>>, vector<1x1xf32>
    %11 = vector.broadcast %10 : vector<1x1xf32> to vector<1x128xf32>
    %12 = arith.addf %9, %11 : vector<1x128xf32>
    %cst_11 = arith.constant 0.000000e+00 : f32
    %13 = vector.broadcast %cst_11 : f32 to vector<1x128xf32>
    %14 = arith.subf %13, %12 : vector<1x128xf32>
    %15 = math.exp %14 : vector<1x128xf32>
    %cst_12 = arith.constant 1.000000e+00 : f32
    %16 = vector.broadcast %cst_12 : f32 to vector<1x128xf32>
    %17 = arith.addf %16, %15 : vector<1x128xf32>
    %cst_13 = arith.constant 1.000000e+00 : f32
    %18 = vector.broadcast %cst_13 : f32 to vector<1x128xf32>
    %19 = arith.divf %18, %17 : vector<1x128xf32>
    %cst_14 = arith.constant 1.000000e+00 : f32
    %20 = vector.broadcast %cst_14 : f32 to vector<1x128xf32>
    %21 = arith.subf %20, %19 : vector<1x128xf32>
    %22 = tpu.concatenate %21, %19 in 0 : vector<1x128xf32>, vector<1x128xf32> -> vector<2x128xf32>
    %c0_15 = arith.constant 0 : index
    %c0_16 = arith.constant 0 : index
    %23 = vector.load %arg6[%c0_15, %c0_16] : memref<2x128xf32, #tpu.memory_space<vmem>>, vector<2x128xf32>
    tpu.vector_store %arg6[%c0_15, %c0_16], %22 {strides = array<i32>} : memref<2x128xf32, #tpu.memory_space<vmem>>, vector<2x128xf32>,
    return
  }
  func.func @transform_0(%arg0: i32) -> (i32, i32) {
    %c0_i32 = arith.constant 0 : i32
    %c0_i32_0 = arith.constant 0 : i32
    return %arg0, %c0_i32 : i32, i32
  }
  func.func @transform_1(%arg0: i32) -> (i32, i32) {
    %c0_i32 = arith.constant 0 : i32
    %c0_i32_0 = arith.constant 0 : i32
    %c0_i32_1 = arith.constant 0 : i32
    return %c0_i32, %c0_i32_0 : i32, i32
  }
  func.func @transform_2(%arg0: i32) -> (i32, i32) {
    %c0_i32 = arith.constant 0 : i32
    %c0_i32_0 = arith.constant 0 : i32
    %c0_i32_1 = arith.constant 0 : i32
    return %c0_i32, %c0_i32_0 : i32, i32
  }
  func.func @transform_3(%arg0: i32) -> (i32, i32) {
    %c0_i32 = arith.constant 0 : i32
    %c0_i32_0 = arith.constant 0 : i32
    %c0_i32_1 = arith.constant 0 : i32
    return %c0_i32, %c0_i32_0 : i32, i32
  }
  func.func @transform_4(%arg0: i32) -> (i32, i32) {
    %c0_i32 = arith.constant 0 : i32
    %c0_i32_0 = arith.constant 0 : i32
    %c0_i32_1 = arith.constant 0 : i32
    return %c0_i32, %c0_i32_0 : i32, i32
  }
  func.func @transform_5(%arg0: i32) -> (i32, i32) {
    %c0_i32 = arith.constant 0 : i32
    %c0_i32_0 = arith.constant 0 : i32
    return %c0_i32, %arg0 : i32, i32
  }
}

</mosaic_0001>

<llo_original>
// kernel: nn_policy_forward.1
$region0: #{nn_policy_forward.1}
  #allocation0 [shape = 'u32[]', space=smem, size = 0x4, offset = 0x4, fixed_abs, tag = 'smem constant byte address 0x4 - core index']
  #allocation1 [shape = 'u32[144,128]{1,0:T(1,128)}', space=vmem, size = 0x12000, scoped, tag = 'internal scratch']
  #allocation2 [shape = 'f32[1,1]{1,0:T(1,128)S(1)}', space=vmem, size = 0x200, scoped, tag = 'scoped memory for nn_policy_forward.1']
  %s0 = inlined_call_operand.vmem [shape: f32[128,4], index: 0, kind: input, shape index: {}]
  %s1 = inlined_call_operand.vmem [shape: f32[128,4], index: 1, kind: input, shape index: {}]
  %s2 = inlined_call_operand.vmem [shape: f32[128,1], index: 2, kind: input, shape index: {}]
  %s3 = inlined_call_operand.vmem [shape: f32[1,128], index: 3, kind: input, shape index: {}]
  %s4 = inlined_call_operand.<no memory space> [shape: f32[1,1], index: 4, kind: input, shape index: {}]
  %s5 = inlined_call_operand.vmem [shape: f32[2,128], index: 5, kind: output, shape index: {}]
  %s6 = sld [smem:[#allocation0]]
  $region30: #{nn_policy_forward.1} parent=0
    _
  %s8 = ssub.s32 1, %s6
  %s9 = scalar_select 0, %s8, %s6
  %v10 = vstv %s4
  %11 = vst [vmem:[#allocation2] sm:$0x1] %v10
  // Predicated region
  $region2: #{nn_policy_forward.1} parent=0 // pred_check
    _
  $region3: #{nn_policy_forward.1} parent=0 // pred_check_branch
    %13 = sbr.rel (0) target = $region5
  $region4: #{nn_policy_forward.1} parent=0 // pred_region
    _
  $region5: #{nn_policy_forward.1} parent=0 // pred_fallthru
    _
  // Predicated region
  $region6: #{nn_policy_forward.1} parent=0 // pred_check
    _
  $region7: #{nn_policy_forward.1} parent=0 // pred_check_branch
    %15 = sbr.rel (0) target = $region9
  $region8: #{nn_policy_forward.1} parent=0 // pred_region
    _
  $region9: #{nn_policy_forward.1} parent=0 // pred_fallthru
    _
  // Predicated region
  $region10: #{nn_policy_forward.1} parent=0 // pred_check
    _
  $region11: #{nn_policy_forward.1} parent=0 // pred_check_branch
    %17 = sbr.rel (0) target = $region13
  $region12: #{nn_policy_forward.1} parent=0 // pred_region
    _
  $region13: #{nn_policy_forward.1} parent=0 // pred_fallthru
    _
  // Predicated region
  $region14: #{nn_policy_forward.1} parent=0 // pred_check
    _
  $region15: #{nn_policy_forward.1} parent=0 // pred_check_branch
    %19 = sbr.rel (0) target = $region17
  $region16: #{nn_policy_forward.1} parent=0 // pred_region
    _
  $region17: #{nn_policy_forward.1} parent=0 // pred_fallthru
    _
  // Predicated region
  $region18: #{nn_policy_forward.1} parent=0 // pred_check
    _
  $region19: #{nn_policy_forward.1} parent=0 // pred_check_branch
    %21 = sbr.rel (0) target = $region21
  $region20: #{nn_policy_forward.1} parent=0 // pred_region
    _
  $region21: #{nn_policy_forward.1} parent=0 // pred_fallthru
    _
  %v22 = vld [vmem:[%s1] sm:$0xff]
  %v23 = vld [vmem:[%s1 + $0x8] sm:$0xff]
  %v24 = vld [vmem:[%s1 + $0x10] sm:$0xff]
  %v25 = vld [vmem:[%s1 + $0x18] sm:$0xff]
  %v26 = vld [vmem:[%s1 + $0x20] sm:$0xff]
  %v27 = vld [vmem:[%s1 + $0x28] sm:$0xff]
  %v28 = vld [vmem:[%s1 + $0x30] sm:$0xff]
  %v29 = vld [vmem:[%s1 + $0x38] sm:$0xff]
  %v30 = vld [vmem:[%s1 + $0x40] sm:$0xff]
  %v31 = vld [vmem:[%s1 + $0x48] sm:$0xff]
  %v32 = vld [vmem:[%s1 + $0x50] sm:$0xff]
  %v33 = vld [vmem:[%s1 + $0x58] sm:$0xff]
  %v34 = vld [vmem:[%s1 + $0x60] sm:$0xff]
  %v35 = vld [vmem:[%s1 + $0x68] sm:$0xff]
  %v36 = vld [vmem:[%s1 + $0x70] sm:$0xff]
  %v37 = vld [vmem:[%s1 + $0x78] sm:$0xff]
  %v38 = vld [vmem:[%s0] sm:$0xff]
  %v39 = vld [vmem:[%s0 + $0x8] sm:$0xff]
  %v40 = vld [vmem:[%s0 + $0x10] sm:$0xff]
  %v41 = vld [vmem:[%s0 + $0x18] sm:$0xff]
  %v42 = vld [vmem:[%s0 + $0x20] sm:$0xff]
  %v43 = vld [vmem:[%s0 + $0x28] sm:$0xff]
  %v44 = vld [vmem:[%s0 + $0x30] sm:$0xff]
  %v45 = vld [vmem:[%s0 + $0x38] sm:$0xff]
  %v46 = vld [vmem:[%s0 + $0x40] sm:$0xff]
  %v47 = vld [vmem:[%s0 + $0x48] sm:$0xff]
  %v48 = vld [vmem:[%s0 + $0x50] sm:$0xff]
  %v49 = vld [vmem:[%s0 + $0x58] sm:$0xff]
  %v50 = vld [vmem:[%s0 + $0x60] sm:$0xff]
  %v51 = vld [vmem:[%s0 + $0x68] sm:$0xff]
  %v52 = vld [vmem:[%s0 + $0x70] sm:$0xff]
  %v53 = vld [vmem:[%s0 + $0x78] sm:$0xff]
  %v54 = vld [vmem:[%s2] sm:$0xff]
  %v55 = vld [vmem:[%s2 + $0x8] sm:$0xff]
  %v56 = vld [vmem:[%s2 + $0x10] sm:$0xff]
  %v57 = vld [vmem:[%s2 + $0x18] sm:$0xff]
  %v58 = vld [vmem:[%s2 + $0x20] sm:$0xff]
  %v59 = vld [vmem:[%s2 + $0x28] sm:$0xff]
  %v60 = vld [vmem:[%s2 + $0x30] sm:$0xff]
  %v61 = vld [vmem:[%s2 + $0x38] sm:$0xff]
  %v62 = vld [vmem:[%s2 + $0x40] sm:$0xff]
  %v63 = vld [vmem:[%s2 + $0x48] sm:$0xff]
  %v64 = vld [vmem:[%s2 + $0x50] sm:$0xff]
  %v65 = vld [vmem:[%s2 + $0x58] sm:$0xff]
  %v66 = vld [vmem:[%s2 + $0x60] sm:$0xff]
  %v67 = vld [vmem:[%s2 + $0x68] sm:$0xff]
  %v68 = vld [vmem:[%s2 + $0x70] sm:$0xff]
  %v69 = vld [vmem:[%s2 + $0x78] sm:$0xff]
  %71 = vset.pattern.permute.xlu0 0
  %72 = vperm.xlu0 %71, %v54
  %v73 = vpop.permute.xlu0 %72
  %76 = vset.pattern.permute.xlu0 0
  %77 = vperm.xlu0 %76, %v55
  %v78 = vpop.permute.xlu0 %77
  %81 = vset.pattern.permute.xlu0 0
  %82 = vperm.xlu0 %81, %v56
  %v83 = vpop.permute.xlu0 %82
  %86 = vset.pattern.permute.xlu0 0
  %87 = vperm.xlu0 %86, %v57
  %v88 = vpop.permute.xlu0 %87
  %91 = vset.pattern.permute.xlu0 0
  %92 = vperm.xlu0 %91, %v58
  %v93 = vpop.permute.xlu0 %92
  %96 = vset.pattern.permute.xlu0 0
  %97 = vperm.xlu0 %96, %v59
  %v98 = vpop.permute.xlu0 %97
  %101 = vset.pattern.permute.xlu0 0
  %102 = vperm.xlu0 %101, %v60
  %v103 = vpop.permute.xlu0 %102
  %106 = vset.pattern.permute.xlu0 0
  %107 = vperm.xlu0 %106, %v61
  %v108 = vpop.permute.xlu0 %107
  %111 = vset.pattern.permute.xlu0 0
  %112 = vperm.xlu0 %111, %v62
  %v113 = vpop.permute.xlu0 %112
  %116 = vset.pattern.permute.xlu0 0
  %117 = vperm.xlu0 %116, %v63
  %v118 = vpop.permute.xlu0 %117
  %121 = vset.pattern.permute.xlu0 0
  %122 = vperm.xlu0 %121, %v64
  %v123 = vpop.permute.xlu0 %122
  %126 = vset.pattern.permute.xlu0 0
  %127 = vperm.xlu0 %126, %v65
  %v128 = vpop.permute.xlu0 %127
  %131 = vset.pattern.permute.xlu0 0
  %132 = vperm.xlu0 %131, %v66
  %v133 = vpop.permute.xlu0 %132
  %136 = vset.pattern.permute.xlu0 0
  %137 = vperm.xlu0 %136, %v67
  %v138 = vpop.permute.xlu0 %137
  %141 = vset.pattern.permute.xlu0 0
  %142 = vperm.xlu0 %141, %v68
  %v143 = vpop.permute.xlu0 %142
  %146 = vset.pattern.permute.xlu0 0
  %147 = vperm.xlu0 %146, %v69
  %v148 = vpop.permute.xlu0 %147
  %vm150 = vcmask 31744
  %v152 = vsel %vm150, %v22, 0
  %v155 = vsel %vm150, %v23, 0
  %v158 = vsel %vm150, %v24, 0
  %v161 = vsel %vm150, %v25, 0
  %v164 = vsel %vm150, %v26, 0
  %v167 = vsel %vm150, %v27, 0
  %v170 = vsel %vm150, %v28, 0
  %v173 = vsel %vm150, %v29, 0
  %v176 = vsel %vm150, %v30, 0
  %v179 = vsel %vm150, %v31, 0
  %v182 = vsel %vm150, %v32, 0
  %v185 = vsel %vm150, %v33, 0
  %v188 = vsel %vm150, %v34, 0
  %v191 = vsel %vm150, %v35, 0
  %v194 = vsel %vm150, %v36, 0
  %v197 = vsel %vm150, %v37, 0
  %v200 = vsel %vm150, %v38, 0
  %v203 = vsel %vm150, %v39, 0
  %v206 = vsel %vm150, %v40, 0
  %v209 = vsel %vm150, %v41, 0
  %v212 = vsel %vm150, %v42, 0
  %v215 = vsel %vm150, %v43, 0
  %v218 = vsel %vm150, %v44, 0
  %v221 = vsel %vm150, %v45, 0
  %v224 = vsel %vm150, %v46, 0
  %v227 = vsel %vm150, %v47, 0
  %v230 = vsel %vm150, %v48, 0
  %v233 = vsel %vm150, %v49, 0
  %v236 = vsel %vm150, %v50, 0
  %v239 = vsel %vm150, %v51, 0
  %v242 = vsel %vm150, %v52, 0
  %v245 = vsel %vm150, %v53, 0
  %247 = vmatprep.subr.mxu0 0.0
  %248 = vmatpush1.xpose.msra.mxu0 %v200
  %249 = vmatprep.subr.mxu0 0.0
  %250 = vmatpush1.xpose.msra.mxu0 %v203
  %251 = vmatprep.subr.mxu0 0.0
  %252 = vmatpush1.xpose.msra.mxu0 %v206
  %253 = vmatprep.subr.mxu0 0.0
  %254 = vmatpush1.xpose.msra.mxu0 %v209
  %255 = vmatprep.subr.mxu0 0.0
  %256 = vmatpush1.xpose.msra.mxu0 %v212
  %257 = vmatprep.subr.mxu0 0.0
  %258 = vmatpush1.xpose.msra.mxu0 %v215
  %259 = vmatprep.subr.mxu0 0.0
  %260 = vmatpush1.xpose.msra.mxu0 %v218
  %261 = vmatprep.subr.mxu0 0.0
  %262 = vmatpush1.xpose.msra.mxu0 %v221
  %263 = vmatprep.subr.mxu0 0.0
  %264 = vmatpush1.xpose.msra.mxu0 %v224
  %265 = vmatprep.subr.mxu0 0.0
  %266 = vmatpush1.xpose.msra.mxu0 %v227
  %267 = vmatprep.subr.mxu0 0.0
  %268 = vmatpush1.xpose.msra.mxu0 %v230
  %269 = vmatprep.subr.mxu0 0.0
  %270 = vmatpush1.xpose.msra.mxu0 %v233
  %271 = vmatprep.subr.mxu0 0.0
  %272 = vmatpush1.xpose.msra.mxu0 %v236
  %273 = vmatprep.subr.mxu0 0.0
  %274 = vmatpush1.xpose.msra.mxu0 %v239
  %275 = vmatprep.subr.mxu0 0.0
  %276 = vmatpush1.xpose.msra.mxu0 %v242
  %277 = vmatprep.subr.mxu0 0.0
  %278 = vmatpush1.xpose.msra.mxu0 %v245
  %279 = vmatprep.subr.mxu0 0.0
  %280 = vmatpush1.xpose.msra.mxu0 0.0
  %281 = vmatprep.subr.mxu0 0.0
  %282 = vmatpush1.xpose.msra.mxu0 0.0
  %283 = vmatprep.subr.mxu0 0.0
  %284 = vmatpush1.xpose.msra.mxu0 0.0
  %285 = vmatprep.subr.mxu0 0.0
  %286 = vmatpush1.xpose.msra.mxu0 0.0
  %287 = vmatprep.subr.mxu0 0.0
  %288 = vmatpush1.xpose.msra.mxu0 0.0
  %289 = vmatprep.subr.mxu0 0.0
  %290 = vmatpush1.xpose.msra.mxu0 0.0
  %291 = vmatprep.subr.mxu0 0.0
  %292 = vmatpush1.xpose.msra.mxu0 0.0
  %293 = vmatprep.subr.mxu0 0.0
  %294 = vmatpush1.xpose.msra.mxu0 0.0
  %295 = vmatprep.subr.mxu0 0.0
  %296 = vmatpush1.xpose.msra.mxu0 0.0
  %297 = vmatprep.subr.mxu0 0.0
  %298 = vmatpush1.xpose.msra.mxu0 0.0
  %299 = vmatprep.subr.mxu0 0.0
  %300 = vmatpush1.xpose.msra.mxu0 0.0
  %301 = vmatprep.subr.mxu0 0.0
  %302 = vmatpush1.xpose.msra.mxu0 0.0
  %303 = vmatprep.subr.mxu0 0.0
  %304 = vmatpush1.xpose.msra.mxu0 0.0
  %305 = vmatprep.subr.mxu0 0.0
  %306 = vmatpush1.xpose.msra.mxu0 0.0
  %307 = vmatprep.subr.mxu0 0.0
  %308 = vmatpush1.xpose.msra.mxu0 0.0
  %309 = vmatprep.subr.mxu0 0.0
  %310 = vmatpush1.xpose.msra.mxu0 0.0
  %311 = vmatprep.mubr.f32.mxu0 0.0
  %312 = vmatmul.mubr.f32.gmra.mrb[0].mxu0 %v152
  %v313 = vpop.f32.mrb[0].mxu0
  %v314 = vadd.f32 %v73, %v313
  %v315 = vpop.f32.mrb[0].mxu0
  %316 = vmatprep.mubr.f32.mxu0 0.0
  %317 = vmatmul.mubr.f32.gmra.mrb[0].mxu0 %v155
  %v318 = vpop.f32.mrb[0].mxu0
  %v319 = vadd.f32 %v78, %v318
  %v320 = vpop.f32.mrb[0].mxu0
  %321 = vmatprep.mubr.f32.mxu0 0.0
  %322 = vmatmul.mubr.f32.gmra.mrb[0].mxu0 %v158
  %v323 = vpop.f32.mrb[0].mxu0
  %v324 = vadd.f32 %v83, %v323
  %v325 = vpop.f32.mrb[0].mxu0
  %326 = vmatprep.mubr.f32.mxu0 0.0
  %327 = vmatmul.mubr.f32.gmra.mrb[0].mxu0 %v161
  %v328 = vpop.f32.mrb[0].mxu0
  %v329 = vadd.f32 %v88, %v328
  %v330 = vpop.f32.mrb[0].mxu0
  %331 = vmatprep.mubr.f32.mxu0 0.0
  %332 = vmatmul.mubr.f32.gmra.mrb[0].mxu0 %v164
  %v333 = vpop.f32.mrb[0].mxu0
  %v334 = vadd.f32 %v93, %v333
  %v335 = vpop.f32.mrb[0].mxu0
  %336 = vmatprep.mubr.f32.mxu0 0.0
  %337 = vmatmul.mubr.f32.gmra.mrb[0].mxu0 %v167
  %v338 = vpop.f32.mrb[0].mxu0
  %v339 = vadd.f32 %v98, %v338
  %v340 = vpop.f32.mrb[0].mxu0
  %341 = vmatprep.mubr.f32.mxu0 0.0
  %342 = vmatmul.mubr.f32.gmra.mrb[0].mxu0 %v170
  %v343 = vpop.f32.mrb[0].mxu0
  %v344 = vadd.f32 %v103, %v343
  %v345 = vpop.f32.mrb[0].mxu0
  %346 = vmatprep.mubr.f32.mxu0 0.0
  %347 = vmatmul.mubr.f32.gmra.mrb[0].mxu0 %v173
  %v348 = vpop.f32.mrb[0].mxu0
  %v349 = vadd.f32 %v108, %v348
  %v350 = vpop.f32.mrb[0].mxu0
  %351 = vmatprep.mubr.f32.mxu0 0.0
  %352 = vmatmul.mubr.f32.gmra.mrb[0].mxu0 %v176
  %v353 = vpop.f32.mrb[0].mxu0
  %v354 = vadd.f32 %v113, %v353
  %v355 = vpop.f32.mrb[0].mxu0
  %356 = vmatprep.mubr.f32.mxu0 0.0
  %357 = vmatmul.mubr.f32.gmra.mrb[0].mxu0 %v179
  %v358 = vpop.f32.mrb[0].mxu0
  %v359 = vadd.f32 %v118, %v358
  %v360 = vpop.f32.mrb[0].mxu0
  %361 = vmatprep.mubr.f32.mxu0 0.0
  %362 = vmatmul.mubr.f32.gmra.mrb[0].mxu0 %v182
  %v363 = vpop.f32.mrb[0].mxu0
  %v364 = vadd.f32 %v123, %v363
  %v365 = vpop.f32.mrb[0].mxu0
  %366 = vmatprep.mubr.f32.mxu0 0.0
  %367 = vmatmul.mubr.f32.gmra.mrb[0].mxu0 %v185
  %v368 = vpop.f32.mrb[0].mxu0
  %v369 = vadd.f32 %v128, %v368
  %v370 = vpop.f32.mrb[0].mxu0
  %371 = vmatprep.mubr.f32.mxu0 0.0
  %372 = vmatmul.mubr.f32.gmra.mrb[0].mxu0 %v188
  %v373 = vpop.f32.mrb[0].mxu0
  %v374 = vadd.f32 %v133, %v373
  %v375 = vpop.f32.mrb[0].mxu0
  %376 = vmatprep.mubr.f32.mxu0 0.0
  %377 = vmatmul.mubr.f32.gmra.mrb[0].mxu0 %v191
  %v378 = vpop.f32.mrb[0].mxu0
  %v379 = vadd.f32 %v138, %v378
  %v380 = vpop.f32.mrb[0].mxu0
  %381 = vmatprep.mubr.f32.mxu0 0.0
  %382 = vmatmul.mubr.f32.gmra.mrb[0].mxu0 %v194
  %v383 = vpop.f32.mrb[0].mxu0
  %v384 = vadd.f32 %v143, %v383
  %v385 = vpop.f32.mrb[0].mxu0
  %386 = vmatprep.mubr.f32.mxu0 0.0
  %387 = vmatmul.mubr.f32.gmra.mrb[0].mxu0 %v197
  %v388 = vpop.f32.mrb[0].mxu0
  %v389 = vadd.f32 %v148, %v388
  %v390 = vpop.f32.mrb[0].mxu0
  %391 = vdwg.mxu0
  %v392 = vmax.f32 %v314, 0.0
  %v393 = vmax.f32 %v319, 0.0
  %v394 = vmax.f32 %v324, 0.0
  %v395 = vmax.f32 %v329, 0.0
  %v396 = vmax.f32 %v334, 0.0
  %v397 = vmax.f32 %v339, 0.0
  %v398 = vmax.f32 %v344, 0.0
  %v399 = vmax.f32 %v349, 0.0
  %v400 = vmax.f32 %v354, 0.0
  %v401 = vmax.f32 %v359, 0.0
  %v402 = vmax.f32 %v364, 0.0
  %v403 = vmax.f32 %v369, 0.0
  %v404 = vmax.f32 %v374, 0.0
  %v405 = vmax.f32 %v379, 0.0
  %v406 = vmax.f32 %v384, 0.0
  %v407 = vmax.f32 %v389, 0.0
  %v408 = vld [vmem:[%s3] sm:$0x1]
  %v409 = vld [vmem:[#allocation2] sm:$0x1]
  %411 = vset.pattern.permute.xlu0 0
  %412 = vperm.xlu0 %411, %v409
  %v413 = vpop.permute.xlu0 %412
  %v415 = vlaneseq
  %v416 = vshrl.u32 %v415, 7
  %v417 = vsub.s32 0, %v416
  %v418 = vrot.slane %v413, %v417
  %419 = vmatprep.subr.mxu0 0.0
  %420 = vmatpush1.msra.mxu0 %v392
  %421 = vmatprep.subr.mxu0 0.0
  %422 = vmatpush1.msra.mxu0 %v393
  %423 = vmatprep.subr.mxu0 0.0
  %424 = vmatpush1.msra.mxu0 %v394
  %425 = vmatprep.subr.mxu0 0.0
  %426 = vmatpush1.msra.mxu0 %v395
  %427 = vmatprep.subr.mxu0 0.0
  %428 = vmatpush1.msra.mxu0 %v396
  %429 = vmatprep.subr.mxu0 0.0
  %430 = vmatpush1.msra.mxu0 %v397
  %431 = vmatprep.subr.mxu0 0.0
  %432 = vmatpush1.msra.mxu0 %v398
  %433 = vmatprep.subr.mxu0 0.0
  %434 = vmatpush1.msra.mxu0 %v399
  %435 = vmatprep.subr.mxu0 0.0
  %436 = vmatpush1.msra.mxu0 %v400
  %437 = vmatprep.subr.mxu0 0.0
  %438 = vmatpush1.msra.mxu0 %v401
  %439 = vmatprep.subr.mxu0 0.0
  %440 = vmatpush1.msra.mxu0 %v402
  %441 = vmatprep.subr.mxu0 0.0
  %442 = vmatpush1.msra.mxu0 %v403
  %443 = vmatprep.subr.mxu0 0.0
  %444 = vmatpush1.msra.mxu0 %v404
  %445 = vmatprep.subr.mxu0 0.0
  %446 = vmatpush1.msra.mxu0 %v405
  %447 = vmatprep.subr.mxu0 0.0
  %448 = vmatpush1.msra.mxu0 %v406
  %449 = vmatprep.subr.mxu0 0.0
  %450 = vmatpush1.msra.mxu0 %v407
  %451 = vmatprep.subr.mxu0 0.0
  %452 = vmatpush1.msra.mxu0 0.0
  %453 = vmatprep.subr.mxu0 0.0
  %454 = vmatpush1.msra.mxu0 0.0
  %455 = vmatprep.subr.mxu0 0.0
  %456 = vmatpush1.msra.mxu0 0.0
  %457 = vmatprep.subr.mxu0 0.0
  %458 = vmatpush1.msra.mxu0 0.0
  %459 = vmatprep.subr.mxu0 0.0
  %460 = vmatpush1.msra.mxu0 0.0
  %461 = vmatprep.subr.mxu0 0.0
  %462 = vmatpush1.msra.mxu0 0.0
  %463 = vmatprep.subr.mxu0 0.0
  %464 = vmatpush1.msra.mxu0 0.0
  %465 = vmatprep.subr.mxu0 0.0
  %466 = vmatpush1.msra.mxu0 0.0
  %467 = vmatprep.subr.mxu0 0.0
  %468 = vmatpush1.msra.mxu0 0.0
  %469 = vmatprep.subr.mxu0 0.0
  %470 = vmatpush1.msra.mxu0 0.0
  %471 = vmatprep.subr.mxu0 0.0
  %472 = vmatpush1.msra.mxu0 0.0
  %473 = vmatprep.subr.mxu0 0.0
  %474 = vmatpush1.msra.mxu0 0.0
  %475 = vmatprep.subr.mxu0 0.0
  %476 = vmatpush1.msra.mxu0 0.0
  %477 = vmatprep.subr.mxu0 0.0
  %478 = vmatpush1.msra.mxu0 0.0
  %479 = vmatprep.subr.mxu0 0.0
  %480 = vmatpush1.msra.mxu0 0.0
  %481 = vmatprep.subr.mxu0 0.0
  %482 = vmatpush1.msra.mxu0 0.0
  %483 = vmatprep.mubr.f32.mxu0 0.0
  %484 = vmatmul.mubr.f32.gmra.mrb[0].mxu0 %v408
  %v485 = vpop.f32.mrb[0].mxu0
  %v486 = vadd.f32 %v418, %v485
  %v487 = vpop.f32.mrb[0].mxu0
  %488 = vdwg.mxu0
  %v489 = vsub.f32 0.0, %v486
  %v490 = vmul.f32 %v489, 1.442695
  %v491 = vpow.pop %v490
  %v492 = vadd.f32 %v491, 1.0
  %v493 = vrcp.pop %v492
  %v494 = vmul.f32 1.0, %v493
  %v495 = vsub.f32 1.0, %v494
  %v497 = vrot.slane %v494, 7
  %vm499 = vcmask 1040384
  %v500 = vsel %vm499, %v495, %v497
  %501 = vst [vmem:[%s5] sm:$0x3] %v500
  // Predicated region
  $region22: #{nn_policy_forward.1} parent=0 // pred_check
    _
  $region23: #{nn_policy_forward.1} parent=0 // pred_check_branch
    %503 = sbr.rel (0) target = $region25
  $region24: #{nn_policy_forward.1} parent=0 // pred_region
    _
  $region25: #{nn_policy_forward.1} parent=0 // pred_fallthru
    _
  // Predicated region
  $region26: #{nn_policy_forward.1} parent=0 // pred_check
    _
  $region27: #{nn_policy_forward.1} parent=0 // pred_check_branch
    %505 = sbr.rel (0) target = $region29
  $region28: #{nn_policy_forward.1} parent=0 // pred_region
    _
  $region29: #{nn_policy_forward.1} parent=0 // pred_fallthru
    _

</llo_original>
